<compile_context>
chip_gen: v7x
topology: tpu7x:2x2x1
jax: 0.10.0
libtpu: 0.0.40
codegen_flags: <defaults>
</compile_context>

<pallas_src>
import numpy as np

import jax
import jax.numpy as jnp
from jax.experimental import pallas as pl
from jax.experimental.pallas import tpu as pltpu


# ----------------------------------------------------------------------------
# Kernel: four lane-dense MXU matmuls per batch tile
#   (TB,16)@(16,384) -> relu -> (TB,384)@(384,256) -> relu
#   -> (TB,256)@(256,256) -> relu -> (TB,256)@(256,8)
# ----------------------------------------------------------------------------
def dqn_kernel(x_ref, w1_ref, b1_ref, w2_ref, b2_ref,
               wfc1_ref, bfc1_ref, wfc2_ref, bfc2_ref, out_ref):
    f32 = jnp.float32
    dt = w1_ref.dtype                      # matmul-input dtype (bf16 default)

    x = x_ref[...].astype(dt)                                        # (TB, 16)

    # conv1 folded: cols ordered (a*3+b)*32 + oc, padded to 12 positions (384)
    h1 = jnp.maximum(
        jnp.dot(x, w1_ref[...], preferred_element_type=f32) + b1_ref[...],
        0.0)

    # conv2 folded: rows ordered pos*32 + c_in, cols (i*2+j)*64 + oc
    h2 = jnp.maximum(
        jnp.dot(h1.astype(dt), w2_ref[...], preferred_element_type=f32)
        + b2_ref[...], 0.0)

    # fc1 (weights pre-permuted to the kernel's flatten order)
    h3 = jnp.maximum(
        jnp.dot(h2.astype(dt), wfc1_ref[...], preferred_element_type=f32)
        + bfc1_ref[...], 0.0)

    # fc2, padded 4 -> 8 output columns; small f32 writeback
    out_ref[...] = (jnp.dot(h3.astype(dt), wfc2_ref[...],
                            preferred_element_type=f32) + bfc2_ref[...])


# ----------------------------------------------------------------------------
# Parameters (PyTorch-shaped) and one-time weight folding
# ----------------------------------------------------------------------------
def init_params(key):
    """Deterministic PyTorch-shaped parameters (uniform, fan_in scaled)."""
    ks = jax.random.split(key, 8)

    def u(k, shape, fan_in):
        bound = 1.0 / float(fan_in) ** 0.5
        return jax.random.uniform(k, shape, jnp.float32, -bound, bound)

    return {
        "conv1_w": u(ks[0], (32, 1, 2, 2), 1 * 2 * 2),
        "conv1_b": u(ks[1], (32,), 1 * 2 * 2),
        "conv2_w": u(ks[2], (64, 32, 2, 2), 32 * 2 * 2),
        "conv2_b": u(ks[3], (64,), 32 * 2 * 2),
        "fc1_w":   u(ks[4], (256, 256), 256),
        "fc1_b":   u(ks[5], (256,), 256),
        "fc2_w":   u(ks[6], (4, 256), 256),
        "fc2_b":   u(ks[7], (4,), 256),
    }


def prepare_dqn_params(params, matmul_dtype=jnp.bfloat16):
    """One-time: fold conv1/conv2 into dense matmul weights (numpy, host)."""
    f32 = np.float32
    w1 = np.asarray(params["conv1_w"], f32)        # (32, 1, 2, 2)
    b1 = np.asarray(params["conv1_b"], f32)
    w2 = np.asarray(params["conv2_w"], f32)        # (64, 32, 2, 2)
    b2 = np.asarray(params["conv2_b"], f32)
    fc1w = np.asarray(params["fc1_w"], f32)        # (256, 256)
    fc1b = np.asarray(params["fc1_b"], f32)
    fc2w = np.asarray(params["fc2_w"], f32)        # (4, 256)
    fc2b = np.asarray(params["fc2_b"], f32)

    # conv1 -> (16, 384): row = pixel r*4+s, col = pos*32 + oc, pos = a*3+b
    # (9 positions used, zero-padded to 12 so the width is a multiple of 128)
    w1e = np.zeros((16, 12, 32), f32)
    b1e = np.zeros((1, 12, 32), f32)
    for a in range(3):
        for bb in range(3):
            b1e[0, a * 3 + bb, :] = b1
            for kh in range(2):
                for kw in range(2):
                    w1e[(a + kh) * 4 + (bb + kw), a * 3 + bb, :] = w1[:, 0, kh, kw]
    w1e = w1e.reshape(16, 384)
    b1e = b1e.reshape(1, 384)

    # conv2 -> (384, 256): row = pos*32 + c_in, col = (i*2+j)*64 + oc
    w2e = np.zeros((12, 32, 4, 64), f32)
    for i in range(2):
        for j in range(2):
            for kh in range(2):
                for kw in range(2):
                    w2e[(i + kh) * 3 + (j + kw), :, i * 2 + j, :] = w2[:, :, kh, kw].T
    w2e = w2e.reshape(384, 256)
    b2e = np.tile(b2, 4).reshape(1, 256)

    # fc1: torch flatten index c*4 + i*2 + j  ->  kernel order (i*2+j)*64 + c
    wfc1 = fc1w.reshape(256, 64, 2, 2).transpose(0, 2, 3, 1).reshape(256, 256).T
    bfc1 = fc1b.reshape(1, 256)

    # fc2: (4,256) -> (256, 8), zero-padded output columns (small writeback)
    wfc2 = np.zeros((256, 8), f32)
    wfc2[:, :4] = fc2w.T
    bfc2 = np.zeros((1, 8), f32)
    bfc2[0, :4] = fc2b

    md = matmul_dtype
    return (jnp.asarray(w1e, md), jnp.asarray(b1e),
            jnp.asarray(w2e, md), jnp.asarray(b2e),
            jnp.asarray(wfc1, md), jnp.asarray(bfc1),
            jnp.asarray(wfc2, md), jnp.asarray(bfc2))


# ----------------------------------------------------------------------------
# Forward wrapper (jitted)
# ----------------------------------------------------------------------------
def _round_up(x, m):
    return (x + m - 1) // m * m


def _dqn_forward_impl(prepped, x, max_batch_tile=512):
    x = jnp.asarray(x, jnp.float32)
    # reproduce the torch shape handling (2-D / 3-D / 4-D inputs)
    if x.ndim == 2:
        x = x[None, None]
    elif x.ndim == 3:
        x = x[:, None]
    assert x.shape[1:] == (1, 4, 4), f"expected (B,1,4,4), got {x.shape}"
    B = x.shape[0]
    xf = x.reshape(B, 16)                              # pixel index r*4 + s

    # Even batch split -> padding < 8 rows per tile; force >= 2 tiles when
    # possible so dimension_semantics=("parallel",) uses both v7x TensorCores.
    num_tiles = max(1, -(-B // max_batch_tile))
    if num_tiles == 1 and _round_up(B, 8) >= 16:
        num_tiles = 2
    TB = _round_up(-(-B // num_tiles), 8)
    Bp = num_tiles * TB
    if Bp != B:
        xf = jnp.pad(xf, ((0, Bp - B), (0, 0)))

    ws = prepped
    # Weights/biases: full-array blocks, constant index_map -> DMA'd once and
    # VMEM-resident for the whole batch grid.
    w_specs = [pl.BlockSpec(w.shape, lambda i: (0, 0)) for w in ws]

    out = pl.pallas_call(
        dqn_kernel,
        out_shape=jax.ShapeDtypeStruct((Bp, 8), jnp.float32),
        grid_spec=pltpu.PrefetchScalarGridSpec(
            num_scalar_prefetch=0,
            grid=(num_tiles,),
            in_specs=[pl.BlockSpec((TB, 16), lambda i: (i, 0))] + w_specs,
            out_specs=pl.BlockSpec((TB, 8), lambda i: (i, 0)),
        ),
        compiler_params=pltpu.CompilerParams(
            dimension_semantics=("parallel",),     # shard batch on v7x 2 TCs
            vmem_limit_bytes=32 * 1024 * 1024,     # huge headroom everywhere
        ),
    )(xf, *ws)
    return out[:B, :4]


dqn_forward = jax.jit(_dqn_forward_impl, static_argnames=("max_batch_tile",))


# ----------------------------------------------------------------------------
# Pure-JAX reference matching the PyTorch forward
# ----------------------------------------------------------------------------
def dqn_reference(params, x):
    prec = jax.lax.Precision.HIGHEST
    x = jnp.asarray(x, jnp.float32)
    if x.ndim == 2:
        x = x[None, None]
    elif x.ndim == 3:
        x = x[:, None]
    dn = ("NCHW", "OIHW", "NCHW")
    h = jax.lax.conv_general_dilated(x, params["conv1_w"], (1, 1), "VALID",
                                     dimension_numbers=dn, precision=prec)
    h = jax.nn.relu(h + params["conv1_b"][None, :, None, None])
    h = jax.lax.conv_general_dilated(h, params["conv2_w"], (1, 1), "VALID",
                                     dimension_numbers=dn, precision=prec)
    h = jax.nn.relu(h + params["conv2_b"][None, :, None, None])
    h = h.reshape(h.shape[0], -1)
    h = jax.nn.relu(jnp.dot(h, params["fc1_w"].T, precision=prec)
                    + params["fc1_b"])
    return jnp.dot(h, params["fc2_w"].T, precision=prec) + params["fc2_b"]


if __name__ == "__main__":
    key = jax.random.PRNGKey(0)
    params = init_params(key)

    # One-time weight folding (hoisted out of the per-call path).
    prepped_bf16 = prepare_dqn_params(params, jnp.bfloat16)   # default / fast
    prepped_f32 = prepare_dqn_params(params, jnp.float32)     # accuracy check

    # small batch (single grid tile)
    x_small = jax.random.normal(jax.random.fold_in(key, 99),
                                (2, 1, 4, 4), jnp.float32)
    ref_s = dqn_reference(params, x_small)

    out_f32 = jax.block_until_ready(dqn_forward(prepped_f32, x_small))
    assert out_f32.shape == (2, 4) and out_f32.dtype == jnp.float32
    assert jnp.allclose(out_f32, ref_s, atol=5e-3, rtol=5e-3), (out_f32, ref_s)

    out_bf16 = jax.block_until_ready(dqn_forward(prepped_bf16, x_small))
    assert out_bf16.shape == (2, 4)
    assert jnp.allclose(out_bf16, ref_s, atol=2e-2, rtol=2e-2), (out_bf16, ref_s)

    # larger batch exercising the pipelined / parallel batch grid
    # (B=600 -> 2 even tiles of 304 rows, only 8 rows of padding)
    x_big = jax.random.normal(jax.random.fold_in(key, 7),
                              (600, 1, 4, 4), jnp.float32)
    ref_b = dqn_reference(params, x_big)
    out_b = jax.block_until_ready(dqn_forward(prepped_bf16, x_big))
    assert out_b.shape == (600, 4)
    assert jnp.allclose(out_b, ref_b, atol=2e-2, rtol=2e-2)

    print("KERNEL_OK")
</pallas_src>

<mosaic_0001>
module attributes {stable_mosaic.version = 11 : i64} {
  func.func @dqn_kernel(%arg0: i32, %arg1: memref<8x16xf32, #tpu.memory_space<vmem>>, %arg2: memref<16x384xf32, #tpu.memory_space<vmem>>, %arg3: memref<1x384xf32, #tpu.memory_space<vmem>>, %arg4: memref<384x256xf32, #tpu.memory_space<vmem>>, %arg5: memref<1x256xf32, #tpu.memory_space<vmem>>, %arg6: memref<256x256xf32, #tpu.memory_space<vmem>>, %arg7: memref<1x256xf32, #tpu.memory_space<vmem>>, %arg8: memref<256x8xf32, #tpu.memory_space<vmem>>, %arg9: memref<1x8xf32, #tpu.memory_space<vmem>>, %arg10: memref<8x8xf32, #tpu.memory_space<vmem>>) attributes {dimension_semantics = [#tpu.dimension_semantics<parallel>], iteration_bounds = array<i64: 1>, scalar_prefetch = 0 : i64, scratch_operands = 0 : i64, tpu.core_type = #tpu.core_type<tc>, window_params = [{transform_indices = @transform_0, window_bounds = array<i64: 8, 16>}, {pipeline_mode = #tpu.pipeline_mode<synchronous>, transform_indices = @transform_1, window_bounds = array<i64: 16, 384>}, {pipeline_mode = #tpu.pipeline_mode<synchronous>, transform_indices = @transform_2, window_bounds = array<i64: 1, 384>}, {pipeline_mode = #tpu.pipeline_mode<synchronous>, transform_indices = @transform_3, window_bounds = array<i64: 384, 256>}, {pipeline_mode = #tpu.pipeline_mode<synchronous>, transform_indices = @transform_4, window_bounds = array<i64: 1, 256>}, {pipeline_mode = #tpu.pipeline_mode<synchronous>, transform_indices = @transform_5, window_bounds = array<i64: 256, 256>}, {pipeline_mode = #tpu.pipeline_mode<synchronous>, transform_indices = @transform_6, window_bounds = array<i64: 1, 256>}, {pipeline_mode = #tpu.pipeline_mode<synchronous>, transform_indices = @transform_7, window_bounds = array<i64: 256, 8>}, {pipeline_mode = #tpu.pipeline_mode<synchronous>, transform_indices = @transform_8, window_bounds = array<i64: 1, 8>}, {transform_indices = @transform_9, window_bounds = array<i64: 8, 8>}]} {
    %c0 = arith.constant 0 : index
    %c0_0 = arith.constant 0 : index
    %0 = vector.load %arg1[%c0, %c0_0] : memref<8x16xf32, #tpu.memory_space<vmem>>, vector<8x16xf32>
    %c0_1 = arith.constant 0 : index
    %c0_2 = arith.constant 0 : index
    %1 = vector.load %arg2[%c0_1, %c0_2] : memref<16x384xf32, #tpu.memory_space<vmem>>, vector<16x384xf32>
    %cst = arith.constant dense<0.000000e+00> : vector<8x384xf32>
    %2 = tpu.matmul %0, %1, %cst {dimension_numbers = #tpu.dot_dimension_numbers<[1], [0], [0], [1], [0, 0, 1, 1], [], []>} : vector<8x16xf32>, vector<16x384xf32>, vector<8x384xf32> -> vector<8x384xf32>
    %c0_3 = arith.constant 0 : index
    %c0_4 = arith.constant 0 : index
    %3 = vector.load %arg3[%c0_3, %c0_4] : memref<1x384xf32, #tpu.memory_space<vmem>>, vector<1x384xf32>
    %4 = vector.broadcast %3 : vector<1x384xf32> to vector<8x384xf32>
    %5 = arith.addf %2, %4 : vector<8x384xf32>
    %cst_5 = arith.constant 0.000000e+00 : f32
    %6 = vector.broadcast %cst_5 : f32 to vector<8x384xf32>
    %7 = arith.maximumf %5, %6 : vector<8x384xf32>
    %c0_6 = arith.constant 0 : index
    %c0_7 = arith.constant 0 : index
    %8 = vector.load %arg4[%c0_6, %c0_7] : memref<384x256xf32, #tpu.memory_space<vmem>>, vector<384x256xf32>
    %cst_8 = arith.constant dense<0.000000e+00> : vector<8x256xf32>
    %9 = tpu.matmul %7, %8, %cst_8 {dimension_numbers = #tpu.dot_dimension_numbers<[1], [0], [0], [1], [0, 0, 1, 1], [], []>} : vector<8x384xf32>, vector<384x256xf32>, vector<8x256xf32> -> vector<8x256xf32>
    %c0_9 = arith.constant 0 : index
    %c0_10 = arith.constant 0 : index
    %10 = vector.load %arg5[%c0_9, %c0_10] : memref<1x256xf32, #tpu.memory_space<vmem>>, vector<1x256xf32>
    %11 = vector.broadcast %10 : vector<1x256xf32> to vector<8x256xf32>
    %12 = arith.addf %9, %11 : vector<8x256xf32>
    %cst_11 = arith.constant 0.000000e+00 : f32
    %13 = vector.broadcast %cst_11 : f32 to vector<8x256xf32>
    %14 = arith.maximumf %12, %13 : vector<8x256xf32>
    %c0_12 = arith.constant 0 : index
    %c0_13 = arith.constant 0 : index
    %15 = vector.load %arg6[%c0_12, %c0_13] : memref<256x256xf32, #tpu.memory_space<vmem>>, vector<256x256xf32>
    %cst_14 = arith.constant dense<0.000000e+00> : vector<8x256xf32>
    %16 = tpu.matmul %14, %15, %cst_14 {dimension_numbers = #tpu.dot_dimension_numbers<[1], [0], [0], [1], [0, 0, 1, 1], [], []>} : vector<8x256xf32>, vector<256x256xf32>, vector<8x256xf32> -> vector<8x256xf32>
    %c0_15 = arith.constant 0 : index
    %c0_16 = arith.constant 0 : index
    %17 = vector.load %arg7[%c0_15, %c0_16] : memref<1x256xf32, #tpu.memory_space<vmem>>, vector<1x256xf32>
    %18 = vector.broadcast %17 : vector<1x256xf32> to vector<8x256xf32>
    %19 = arith.addf %16, %18 : vector<8x256xf32>
    %cst_17 = arith.constant 0.000000e+00 : f32
    %20 = vector.broadcast %cst_17 : f32 to vector<8x256xf32>
    %21 = arith.maximumf %19, %20 : vector<8x256xf32>
    %c0_18 = arith.constant 0 : index
    %c0_19 = arith.constant 0 : index
    %22 = vector.load %arg8[%c0_18, %c0_19] : memref<256x8xf32, #tpu.memory_space<vmem>>, vector<256x8xf32>
    %cst_20 = arith.constant dense<0.000000e+00> : vector<8x8xf32>
    %23 = tpu.matmul %21, %22, %cst_20 {dimension_numbers = #tpu.dot_dimension_numbers<[1], [0], [0], [1], [0, 0, 1, 1], [], []>} : vector<8x256xf32>, vector<256x8xf32>, vector<8x8xf32> -> vector<8x8xf32>
    %c0_21 = arith.constant 0 : index
    %c0_22 = arith.constant 0 : index
    %24 = vector.load %arg9[%c0_21, %c0_22] : memref<1x8xf32, #tpu.memory_space<vmem>>, vector<1x8xf32>
    %25 = vector.broadcast %24 : vector<1x8xf32> to vector<8x8xf32>
    %26 = arith.addf %23, %25 : vector<8x8xf32>
    %c0_23 = arith.constant 0 : index
    %c0_24 = arith.constant 0 : index
    %27 = vector.load %arg10[%c0_23, %c0_24] : memref<8x8xf32, #tpu.memory_space<vmem>>, vector<8x8xf32>
    tpu.vector_store %arg10[%c0_23, %c0_24], %26 {strides = array<i32>} : memref<8x8xf32, #tpu.memory_space<vmem>>, vector<8x8xf32>,
    return
  }
  func.func @transform_0(%arg0: i32) -> (i32, i32) {
    %c0_i32 = arith.constant 0 : i32
    %c0_i32_0 = arith.constant 0 : i32
    return %arg0, %c0_i32 : i32, i32
  }
  func.func @transform_1(%arg0: i32) -> (i32, i32) {
    %c0_i32 = arith.constant 0 : i32
    %c0_i32_0 = arith.constant 0 : i32
    %c0_i32_1 = arith.constant 0 : i32
    return %c0_i32, %c0_i32_0 : i32, i32
  }
  func.func @transform_2(%arg0: i32) -> (i32, i32) {
    %c0_i32 = arith.constant 0 : i32
    %c0_i32_0 = arith.constant 0 : i32
    %c0_i32_1 = arith.constant 0 : i32
    return %c0_i32, %c0_i32_0 : i32, i32
  }
  func.func @transform_3(%arg0: i32) -> (i32, i32) {
    %c0_i32 = arith.constant 0 : i32
    %c0_i32_0 = arith.constant 0 : i32
    %c0_i32_1 = arith.constant 0 : i32
    return %c0_i32, %c0_i32_0 : i32, i32
  }
  func.func @transform_4(%arg0: i32) -> (i32, i32) {
    %c0_i32 = arith.constant 0 : i32
    %c0_i32_0 = arith.constant 0 : i32
    %c0_i32_1 = arith.constant 0 : i32
    return %c0_i32, %c0_i32_0 : i32, i32
  }
  func.func @transform_5(%arg0: i32) -> (i32, i32) {
    %c0_i32 = arith.constant 0 : i32
    %c0_i32_0 = arith.constant 0 : i32
    %c0_i32_1 = arith.constant 0 : i32
    return %c0_i32, %c0_i32_0 : i32, i32
  }
  func.func @transform_6(%arg0: i32) -> (i32, i32) {
    %c0_i32 = arith.constant 0 : i32
    %c0_i32_0 = arith.constant 0 : i32
    %c0_i32_1 = arith.constant 0 : i32
    return %c0_i32, %c0_i32_0 : i32, i32
  }
  func.func @transform_7(%arg0: i32) -> (i32, i32) {
    %c0_i32 = arith.constant 0 : i32
    %c0_i32_0 = arith.constant 0 : i32
    %c0_i32_1 = arith.constant 0 : i32
    return %c0_i32, %c0_i32_0 : i32, i32
  }
  func.func @transform_8(%arg0: i32) -> (i32, i32) {
    %c0_i32 = arith.constant 0 : i32
    %c0_i32_0 = arith.constant 0 : i32
    %c0_i32_1 = arith.constant 0 : i32
    return %c0_i32, %c0_i32_0 : i32, i32
  }
  func.func @transform_9(%arg0: i32) -> (i32, i32) {
    %c0_i32 = arith.constant 0 : i32
    %c0_i32_0 = arith.constant 0 : i32
    return %arg0, %c0_i32 : i32, i32
  }
}

</mosaic_0001>

<llo_original>
// kernel: _dqn_forward_impl.1
$region0: #{_dqn_forward_impl.1}
  #allocation0 [shape = 'u32[]', space=smem, size = 0x4, offset = 0x4, fixed_abs, tag = 'smem constant byte address 0x4 - core index']
  #allocation1 [shape = 'u32[144,128]{1,0:T(1,128)}', space=vmem, size = 0x12000, scoped, tag = 'internal scratch']
  %s0 = inlined_call_operand.vmem [shape: f32[8,16], index: 0, kind: input, shape index: {}]
  %s1 = inlined_call_operand.vmem [shape: f32[16,384], index: 1, kind: input, shape index: {}]
  %s2 = inlined_call_operand.vmem [shape: f32[1,384], index: 2, kind: input, shape index: {}]
  %s3 = inlined_call_operand.hbm [shape: f32[384,256], index: 3, kind: input, shape index: {}]
  %s4 = inlined_call_operand.vmem [shape: f32[1,256], index: 4, kind: input, shape index: {}]
  %s5 = inlined_call_operand.hbm [shape: f32[256,256], index: 5, kind: input, shape index: {}]
  %s6 = inlined_call_operand.vmem [shape: f32[1,256], index: 6, kind: input, shape index: {}]
  %s7 = inlined_call_operand.vmem [shape: f32[256,8], index: 7, kind: input, shape index: {}]
  %s8 = inlined_call_operand.vmem [shape: f32[1,8], index: 8, kind: input, shape index: {}]
  %s9 = inlined_call_operand.vmem [shape: f32[8,8], index: 9, kind: output, shape index: {}]
  %s10 = sld [smem:[#allocation0]]
  $region54: #{_dqn_forward_impl.1} parent=0
    _
  %s12 = ssub.s32 1, %s10
  %s13 = scalar_select 0, %s12, %s10
  $region1: #{_dqn_forward_impl.1} parent=0
    #allocation2 [shape = 'u8[393216]{0}', space=vmem, size = 0x60000, scoped, tag = 'input window, operand 3, single buffered']
    #allocation3 [shape = 's32[1]{0}', space=sflag, size = 0x4, scoped, tag = 'scoped memory for _dqn_forward_impl.1']
    #allocation4 [shape = 'u8[262144]{0}', space=vmem, size = 0x40000, scoped, tag = 'input window, operand 5, single buffered']
    #allocation5 [shape = 's32[1]{0}', space=sflag, size = 0x4, scoped, tag = 'scoped memory for _dqn_forward_impl.1']
    %14 = vsyncpa [#allocation3], 0
    %15 = vsyncpa [#allocation5], 0
    // Predicated region
    $region2: #{_dqn_forward_impl.1} parent=1 // pred_check
      _
    $region3: #{_dqn_forward_impl.1} parent=1 // pred_check_branch
      %17 = sbr.rel (0) target = $region5
    $region4: #{_dqn_forward_impl.1} parent=1 // pred_region
      _
    $region5: #{_dqn_forward_impl.1} parent=1 // pred_fallthru
      _
    // Predicated region
    $region6: #{_dqn_forward_impl.1} parent=1 // pred_check
      _
    $region7: #{_dqn_forward_impl.1} parent=1 // pred_check_branch
      %19 = sbr.rel (0) target = $region9
    $region8: #{_dqn_forward_impl.1} parent=1 // pred_region
      _
    $region9: #{_dqn_forward_impl.1} parent=1 // pred_fallthru
      _
    // Predicated region
    $region10: #{_dqn_forward_impl.1} parent=1 // pred_check
      _
    $region11: #{_dqn_forward_impl.1} parent=1 // pred_check_branch
      %21 = sbr.rel (0) target = $region13
    $region12: #{_dqn_forward_impl.1} parent=1 // pred_region
      _
    $region13: #{_dqn_forward_impl.1} parent=1 // pred_fallthru
      _
    // Predicated region
    $region14: #{_dqn_forward_impl.1} parent=1 // pred_check
      _
    $region15: #{_dqn_forward_impl.1} parent=1 // pred_check_branch
      %23 = sbr.rel (0) target = $region17
    $region16: #{_dqn_forward_impl.1} parent=1 // pred_region
      %s25 = ssub.s32 12288, 12288
      %26 = vsyncadd [#allocation3], %s25
      %s27 = sshll.u32 [#allocation2], 4
      %s28 = int_to_ptr.vmem [resolvable:$true] %s27
      %33 = dma.hbm_to_vmem [thread:$0]  %s3, 12288, %s28, [#allocation3], 256, 256, 16
    $region17: #{_dqn_forward_impl.1} parent=1 // pred_fallthru
      _
    // Predicated region
    $region18: #{_dqn_forward_impl.1} parent=1 // pred_check
      _
    $region19: #{_dqn_forward_impl.1} parent=1 // pred_check_branch
      %35 = sbr.rel (0) target = $region21
    $region20: #{_dqn_forward_impl.1} parent=1 // pred_region
      _
    $region21: #{_dqn_forward_impl.1} parent=1 // pred_fallthru
      _
    // Predicated region
    $region22: #{_dqn_forward_impl.1} parent=1 // pred_check
      _
    $region23: #{_dqn_forward_impl.1} parent=1 // pred_check_branch
      %37 = sbr.rel (0) target = $region25
    $region24: #{_dqn_forward_impl.1} parent=1 // pred_region
      %s39 = ssub.s32 8192, 8192
      %40 = vsyncadd [#allocation5], %s39
      %s41 = sshll.u32 [#allocation4], 4
      %s42 = int_to_ptr.vmem [resolvable:$true] %s41
      %47 = dma.hbm_to_vmem [thread:$0]  %s5, 8192, %s42, [#allocation5], 256, 256, 16
    $region25: #{_dqn_forward_impl.1} parent=1 // pred_fallthru
      _
    // Predicated region
    $region26: #{_dqn_forward_impl.1} parent=1 // pred_check
      _
    $region27: #{_dqn_forward_impl.1} parent=1 // pred_check_branch
      %49 = sbr.rel (0) target = $region29
    $region28: #{_dqn_forward_impl.1} parent=1 // pred_region
      _
    $region29: #{_dqn_forward_impl.1} parent=1 // pred_fallthru
      _
    // Predicated region
    $region30: #{_dqn_forward_impl.1} parent=1 // pred_check
      _
    $region31: #{_dqn_forward_impl.1} parent=1 // pred_check_branch
      %51 = sbr.rel (0) target = $region33
    $region32: #{_dqn_forward_impl.1} parent=1 // pred_region
      _
    $region33: #{_dqn_forward_impl.1} parent=1 // pred_fallthru
      _
    // Predicated region
    $region34: #{_dqn_forward_impl.1} parent=1 // pred_check
      _
    $region35: #{_dqn_forward_impl.1} parent=1 // pred_check_branch
      %53 = sbr.rel (0) target = $region37
    $region36: #{_dqn_forward_impl.1} parent=1 // pred_region
      _
    $region37: #{_dqn_forward_impl.1} parent=1 // pred_fallthru
      _
    // Predicated region
    $region38: #{_dqn_forward_impl.1} parent=1 // pred_check
      _
    $region39: #{_dqn_forward_impl.1} parent=1 // pred_check_branch
      %55 = sbr.rel (0) target = $region41
    $region40: #{_dqn_forward_impl.1} parent=1 // pred_region
      %56 = dma.done [#allocation3], 12288
    $region41: #{_dqn_forward_impl.1} parent=1 // pred_fallthru
      _
    // Predicated region
    $region42: #{_dqn_forward_impl.1} parent=1 // pred_check
      _
    $region43: #{_dqn_forward_impl.1} parent=1 // pred_check_branch
      %58 = sbr.rel (0) target = $region45
    $region44: #{_dqn_forward_impl.1} parent=1 // pred_region
      %59 = dma.done [#allocation5], 8192
    $region45: #{_dqn_forward_impl.1} parent=1 // pred_fallthru
      _
    %v60 = vld [vmem:[%s0] sm:$0xff]
    %v61 = vld [vmem:[%s1] sm:$0xff]
    %v62 = vld [vmem:[%s1 + $0x8] sm:$0xff]
    %v63 = vld [vmem:[%s1 + $0x10] sm:$0xff]
    %v64 = vld [vmem:[%s1 + $0x18] sm:$0xff]
    %v65 = vld [vmem:[%s1 + $0x20] sm:$0xff]
    %v66 = vld [vmem:[%s1 + $0x28] sm:$0xff]
    %v67 = vld [vmem:[%s2] sm:$0x7]
    %v69 = vlaneseq
    %v70 = vshrl.u32 %v69, 7
    %v71 = vsub.s32 0, %v70
    %v72 = vrot.slane %v67, %v71
    %v73 = vlaneseq
    %v74 = vshrl.u32 %v73, 7
    %v75 = vsub.s32 1, %v74
    %v76 = vrot.slane %v67, %v75
    %v77 = vlaneseq
    %v78 = vshrl.u32 %v77, 7
    %v79 = vsub.s32 2, %v78
    %v80 = vrot.slane %v67, %v79
    %vm84 = vcmask 130048
    %v86 = vsel %vm84, %v60, 0
    %88 = vmatprep.subr.mxu0 %v62
    %89 = vmatpush1.msra.mxu0 %v61
    %90 = vmatprep.subr.mxu0 %v65
    %91 = vmatpush1.msra.mxu0 %v64
    %92 = vmatprep.subr.mxu0 0.0
    %93 = vmatpush1.msra.mxu0 0.0
    %94 = vmatprep.subr.mxu0 0.0
    %95 = vmatpush1.msra.mxu0 0.0
    %96 = vmatprep.subr.mxu0 0.0
    %97 = vmatpush1.msra.mxu0 0.0
    %98 = vmatprep.subr.mxu0 0.0
    %99 = vmatpush1.msra.mxu0 0.0
    %100 = vmatprep.subr.mxu0 0.0
    %101 = vmatpush1.msra.mxu0 0.0
    %102 = vmatprep.subr.mxu0 0.0
    %103 = vmatpush1.msra.mxu0 0.0
    %104 = vmatprep.subr.mxu0 0.0
    %105 = vmatpush1.msra.mxu0 0.0
    %106 = vmatprep.subr.mxu0 0.0
    %107 = vmatpush1.msra.mxu0 0.0
    %108 = vmatprep.subr.mxu0 0.0
    %109 = vmatpush1.msra.mxu0 0.0
    %110 = vmatprep.subr.mxu0 0.0
    %111 = vmatpush1.msra.mxu0 0.0
    %112 = vmatprep.subr.mxu0 0.0
    %113 = vmatpush1.msra.mxu0 0.0
    %114 = vmatprep.subr.mxu0 0.0
    %115 = vmatpush1.msra.mxu0 0.0
    %116 = vmatprep.subr.mxu0 0.0
    %117 = vmatpush1.msra.mxu0 0.0
    %118 = vmatprep.subr.mxu0 0.0
    %119 = vmatpush1.msra.mxu0 0.0
    %120 = vmatprep.subr.mxu0 0.0
    %121 = vmatpush1.msra.mxu0 0.0
    %122 = vmatprep.subr.mxu0 0.0
    %123 = vmatpush1.msra.mxu0 0.0
    %124 = vmatprep.subr.mxu0 0.0
    %125 = vmatpush1.msra.mxu0 0.0
    %126 = vmatprep.subr.mxu0 0.0
    %127 = vmatpush1.msra.mxu0 0.0
    %128 = vmatprep.subr.mxu0 0.0
    %129 = vmatpush1.msra.mxu0 0.0
    %130 = vmatprep.subr.mxu0 0.0
    %131 = vmatpush1.msra.mxu0 0.0
    %132 = vmatprep.subr.mxu0 0.0
    %133 = vmatpush1.msra.mxu0 0.0
    %134 = vmatprep.subr.mxu0 0.0
    %135 = vmatpush1.msra.mxu0 0.0
    %136 = vmatprep.subr.mxu0 0.0
    %137 = vmatpush1.msra.mxu0 0.0
    %138 = vmatprep.subr.mxu0 0.0
    %139 = vmatpush1.msra.mxu0 0.0
    %140 = vmatprep.subr.mxu0 0.0
    %141 = vmatpush1.msra.mxu0 0.0
    %142 = vmatprep.subr.mxu0 0.0
    %143 = vmatpush1.msra.mxu0 0.0
    %144 = vmatprep.subr.mxu0 0.0
    %145 = vmatpush1.msra.mxu0 0.0
    %146 = vmatprep.subr.mxu0 0.0
    %147 = vmatpush1.msra.mxu0 0.0
    %148 = vmatprep.subr.mxu0 0.0
    %149 = vmatpush1.msra.mxu0 0.0
    %150 = vmatprep.subr.mxu0 0.0
    %151 = vmatpush1.msra.mxu0 0.0
    %152 = vmatprep.mubr.f32.mxu0 0.0
    %153 = vmatmul.mubr.f32.gmra.mrb[0].mxu0 %v86
    %v154 = vpop.f32.mrb[0].mxu0
    %v155 = vadd.f32 %v72, %v154
    %v156 = vpop.f32.mrb[0].mxu0
    %v157 = vadd.f32 %v76, %v156
    %158 = vdwg.mxu0
    %159 = vmatprep.subr.mxu0 0.0
    %160 = vmatpush1.msra.mxu0 %v63
    %161 = vmatprep.subr.mxu0 0.0
    %162 = vmatpush1.msra.mxu0 %v66
    %163 = vmatprep.subr.mxu0 0.0
    %164 = vmatpush1.msra.mxu0 0.0
    %165 = vmatprep.subr.mxu0 0.0
    %166 = vmatpush1.msra.mxu0 0.0
    %167 = vmatprep.subr.mxu0 0.0
    %168 = vmatpush1.msra.mxu0 0.0
    %169 = vmatprep.subr.mxu0 0.0
    %170 = vmatpush1.msra.mxu0 0.0
    %171 = vmatprep.subr.mxu0 0.0
    %172 = vmatpush1.msra.mxu0 0.0
    %173 = vmatprep.subr.mxu0 0.0
    %174 = vmatpush1.msra.mxu0 0.0
    %175 = vmatprep.subr.mxu0 0.0
    %176 = vmatpush1.msra.mxu0 0.0
    %177 = vmatprep.subr.mxu0 0.0
    %178 = vmatpush1.msra.mxu0 0.0
    %179 = vmatprep.subr.mxu0 0.0
    %180 = vmatpush1.msra.mxu0 0.0
    %181 = vmatprep.subr.mxu0 0.0
    %182 = vmatpush1.msra.mxu0 0.0
    %183 = vmatprep.subr.mxu0 0.0
    %184 = vmatpush1.msra.mxu0 0.0
    %185 = vmatprep.subr.mxu0 0.0
    %186 = vmatpush1.msra.mxu0 0.0
    %187 = vmatprep.subr.mxu0 0.0
    %188 = vmatpush1.msra.mxu0 0.0
    %189 = vmatprep.subr.mxu0 0.0
    %190 = vmatpush1.msra.mxu0 0.0
    %191 = vmatprep.subr.mxu0 0.0
    %192 = vmatpush1.msra.mxu0 0.0
    %193 = vmatprep.subr.mxu0 0.0
    %194 = vmatpush1.msra.mxu0 0.0
    %195 = vmatprep.subr.mxu0 0.0
    %196 = vmatpush1.msra.mxu0 0.0
    %197 = vmatprep.subr.mxu0 0.0
    %198 = vmatpush1.msra.mxu0 0.0
    %199 = vmatprep.subr.mxu0 0.0
    %200 = vmatpush1.msra.mxu0 0.0
    %201 = vmatprep.subr.mxu0 0.0
    %202 = vmatpush1.msra.mxu0 0.0
    %203 = vmatprep.subr.mxu0 0.0
    %204 = vmatpush1.msra.mxu0 0.0
    %205 = vmatprep.subr.mxu0 0.0
    %206 = vmatpush1.msra.mxu0 0.0
    %207 = vmatprep.subr.mxu0 0.0
    %208 = vmatpush1.msra.mxu0 0.0
    %209 = vmatprep.subr.mxu0 0.0
    %210 = vmatpush1.msra.mxu0 0.0
    %211 = vmatprep.subr.mxu0 0.0
    %212 = vmatpush1.msra.mxu0 0.0
    %213 = vmatprep.subr.mxu0 0.0
    %214 = vmatpush1.msra.mxu0 0.0
    %215 = vmatprep.subr.mxu0 0.0
    %216 = vmatpush1.msra.mxu0 0.0
    %217 = vmatprep.subr.mxu0 0.0
    %218 = vmatpush1.msra.mxu0 0.0
    %219 = vmatprep.subr.mxu0 0.0
    %220 = vmatpush1.msra.mxu0 0.0
    %221 = vmatprep.subr.mxu0 0.0
    %222 = vmatpush1.msra.mxu0 0.0
    %223 = vmatprep.mubr.f32.mxu0 0.0
    %224 = vmatmul.mubr.f32.gmra.mrb[0].mxu0 %v86
    %v225 = vpop.f32.mrb[0].mxu0
    %v226 = vadd.f32 %v80, %v225
    %v227 = vpop.f32.mrb[0].mxu0
    %228 = vdwg.mxu0
    %v229 = vmax.f32 %v155, 0.0
    %v230 = vmax.f32 %v157, 0.0
    %v231 = vmax.f32 %v226, 0.0
    %v232 = vld [vmem:[#allocation2] sm:$0xff]
    %v233 = vld [vmem:[#allocation2 + $0x8] sm:$0xff]
    %v234 = vld [vmem:[#allocation2 + $0x10] sm:$0xff]
    %v235 = vld [vmem:[#allocation2 + $0x18] sm:$0xff]
    %v236 = vld [vmem:[#allocation2 + $0x20] sm:$0xff]
    %v237 = vld [vmem:[#allocation2 + $0x28] sm:$0xff]
    %v238 = vld [vmem:[#allocation2 + $0x30] sm:$0xff]
    %v239 = vld [vmem:[#allocation2 + $0x38] sm:$0xff]
    %v240 = vld [vmem:[#allocation2 + $0x40] sm:$0xff]
    %v241 = vld [vmem:[#allocation2 + $0x48] sm:$0xff]
    %v242 = vld [vmem:[#allocation2 + $0x50] sm:$0xff]
    %v243 = vld [vmem:[#allocation2 + $0x58] sm:$0xff]
    %v244 = vld [vmem:[#allocation2 + $0x60] sm:$0xff]
    %v245 = vld [vmem:[#allocation2 + $0x68] sm:$0xff]
    %v246 = vld [vmem:[#allocation2 + $0x70] sm:$0xff]
    %v247 = vld [vmem:[#allocation2 + $0x78] sm:$0xff]
    %v248 = vld [vmem:[#allocation2 + $0x80] sm:$0xff]
    %v249 = vld [vmem:[#allocation2 + $0x88] sm:$0xff]
    %v250 = vld [vmem:[#allocation2 + $0x90] sm:$0xff]
    %v251 = vld [vmem:[#allocation2 + $0x98] sm:$0xff]
    %v252 = vld [vmem:[#allocation2 + $0xa0] sm:$0xff]
    %v253 = vld [vmem:[#allocation2 + $0xa8] sm:$0xff]
    %v254 = vld [vmem:[#allocation2 + $0xb0] sm:$0xff]
    %v255 = vld [vmem:[#allocation2 + $0xb8] sm:$0xff]
    %v256 = vld [vmem:[#allocation2 + $0xc0] sm:$0xff]
    %v257 = vld [vmem:[#allocation2 + $0xc8] sm:$0xff]
    %v258 = vld [vmem:[#allocation2 + $0xd0] sm:$0xff]
    %v259 = vld [vmem:[#allocation2 + $0xd8] sm:$0xff]
    %v260 = vld [vmem:[#allocation2 + $0xe0] sm:$0xff]
    %v261 = vld [vmem:[#allocation2 + $0xe8] sm:$0xff]
    %v262 = vld [vmem:[#allocation2 + $0xf0] sm:$0xff]
    %v263 = vld [vmem:[#allocation2 + $0xf8] sm:$0xff]
    %v264 = vld [vmem:[#allocation2 + $0x100] sm:$0xff]
    %v265 = vld [vmem:[#allocation2 + $0x108] sm:$0xff]
    %v266 = vld [vmem:[#allocation2 + $0x110] sm:$0xff]
    %v267 = vld [vmem:[#allocation2 + $0x118] sm:$0xff]
    %v268 = vld [vmem:[#allocation2 + $0x120] sm:$0xff]
    %v269 = vld [vmem:[#allocation2 + $0x128] sm:$0xff]
    %v270 = vld [vmem:[#allocation2 + $0x130] sm:$0xff]
    %v271 = vld [vmem:[#allocation2 + $0x138] sm:$0xff]
    %v272 = vld [vmem:[#allocation2 + $0x140] sm:$0xff]
    %v273 = vld [vmem:[#allocation2 + $0x148] sm:$0xff]
    %v274 = vld [vmem:[#allocation2 + $0x150] sm:$0xff]
    %v275 = vld [vmem:[#allocation2 + $0x158] sm:$0xff]
    %v276 = vld [vmem:[#allocation2 + $0x160] sm:$0xff]
    %v277 = vld [vmem:[#allocation2 + $0x168] sm:$0xff]
    %v278 = vld [vmem:[#allocation2 + $0x170] sm:$0xff]
    %v279 = vld [vmem:[#allocation2 + $0x178] sm:$0xff]
    %v280 = vld [vmem:[#allocation2 + $0x180] sm:$0xff]
    %v281 = vld [vmem:[#allocation2 + $0x188] sm:$0xff]
    %v282 = vld [vmem:[#allocation2 + $0x190] sm:$0xff]
    %v283 = vld [vmem:[#allocation2 + $0x198] sm:$0xff]
    %v284 = vld [vmem:[#allocation2 + $0x1a0] sm:$0xff]
    %v285 = vld [vmem:[#allocation2 + $0x1a8] sm:$0xff]
    %v286 = vld [vmem:[#allocation2 + $0x1b0] sm:$0xff]
    %v287 = vld [vmem:[#allocation2 + $0x1b8] sm:$0xff]
    %v288 = vld [vmem:[#allocation2 + $0x1c0] sm:$0xff]
    %v289 = vld [vmem:[#allocation2 + $0x1c8] sm:$0xff]
    %v290 = vld [vmem:[#allocation2 + $0x1d0] sm:$0xff]
    %v291 = vld [vmem:[#allocation2 + $0x1d8] sm:$0xff]
    %v292 = vld [vmem:[#allocation2 + $0x1e0] sm:$0xff]
    %v293 = vld [vmem:[#allocation2 + $0x1e8] sm:$0xff]
    %v294 = vld [vmem:[#allocation2 + $0x1f0] sm:$0xff]
    %v295 = vld [vmem:[#allocation2 + $0x1f8] sm:$0xff]
    %v296 = vld [vmem:[#allocation2 + $0x200] sm:$0xff]
    %v297 = vld [vmem:[#allocation2 + $0x208] sm:$0xff]
    %v298 = vld [vmem:[#allocation2 + $0x210] sm:$0xff]
    %v299 = vld [vmem:[#allocation2 + $0x218] sm:$0xff]
    %v300 = vld [vmem:[#allocation2 + $0x220] sm:$0xff]
    %v301 = vld [vmem:[#allocation2 + $0x228] sm:$0xff]
    %v302 = vld [vmem:[#allocation2 + $0x230] sm:$0xff]
    %v303 = vld [vmem:[#allocation2 + $0x238] sm:$0xff]
    %v304 = vld [vmem:[#allocation2 + $0x240] sm:$0xff]
    %v305 = vld [vmem:[#allocation2 + $0x248] sm:$0xff]
    %v306 = vld [vmem:[#allocation2 + $0x250] sm:$0xff]
    %v307 = vld [vmem:[#allocation2 + $0x258] sm:$0xff]
    %v308 = vld [vmem:[#allocation2 + $0x260] sm:$0xff]
    %v309 = vld [vmem:[#allocation2 + $0x268] sm:$0xff]
    %v310 = vld [vmem:[#allocation2 + $0x270] sm:$0xff]
    %v311 = vld [vmem:[#allocation2 + $0x278] sm:$0xff]
    %v312 = vld [vmem:[#allocation2 + $0x280] sm:$0xff]
    %v313 = vld [vmem:[#allocation2 + $0x288] sm:$0xff]
    %v314 = vld [vmem:[#allocation2 + $0x290] sm:$0xff]
    %v315 = vld [vmem:[#allocation2 + $0x298] sm:$0xff]
    %v316 = vld [vmem:[#allocation2 + $0x2a0] sm:$0xff]
    %v317 = vld [vmem:[#allocation2 + $0x2a8] sm:$0xff]
    %v318 = vld [vmem:[#allocation2 + $0x2b0] sm:$0xff]
    %v319 = vld [vmem:[#allocation2 + $0x2b8] sm:$0xff]
    %v320 = vld [vmem:[#allocation2 + $0x2c0] sm:$0xff]
    %v321 = vld [vmem:[#allocation2 + $0x2c8] sm:$0xff]
    %v322 = vld [vmem:[#allocation2 + $0x2d0] sm:$0xff]
    %v323 = vld [vmem:[#allocation2 + $0x2d8] sm:$0xff]
    %v324 = vld [vmem:[#allocation2 + $0x2e0] sm:$0xff]
    %v325 = vld [vmem:[#allocation2 + $0x2e8] sm:$0xff]
    %v326 = vld [vmem:[#allocation2 + $0x2f0] sm:$0xff]
    %v327 = vld [vmem:[#allocation2 + $0x2f8] sm:$0xff]
    %v328 = vld [vmem:[%s4] sm:$0x3]
    %v330 = vlaneseq
    %v331 = vshrl.u32 %v330, 7
    %v332 = vsub.s32 0, %v331
    %v333 = vrot.slane %v328, %v332
    %v334 = vlaneseq
    %v335 = vshrl.u32 %v334, 7
    %v336 = vsub.s32 1, %v335
    %v337 = vrot.slane %v328, %v336
    %340 = vmatprep.subr.mxu0 %v233
    %341 = vmatpush1.msra.mxu0 %v232
    %342 = vmatprep.subr.mxu0 %v235
    %343 = vmatpush1.msra.mxu0 %v234
    %344 = vmatprep.subr.mxu0 %v237
    %345 = vmatpush1.msra.mxu0 %v236
    %346 = vmatprep.subr.mxu0 %v239
    %347 = vmatpush1.msra.mxu0 %v238
    %348 = vmatprep.subr.mxu0 %v241
    %349 = vmatpush1.msra.mxu0 %v240
    %350 = vmatprep.subr.mxu0 %v243
    %351 = vmatpush1.msra.mxu0 %v242
    %352 = vmatprep.subr.mxu0 %v245
    %353 = vmatpush1.msra.mxu0 %v244
    %354 = vmatprep.subr.mxu0 %v247
    %355 = vmatpush1.msra.mxu0 %v246
    %356 = vmatprep.subr.mxu0 %v249
    %357 = vmatpush1.msra.mxu0 %v248
    %358 = vmatprep.subr.mxu0 %v251
    %359 = vmatpush1.msra.mxu0 %v250
    %360 = vmatprep.subr.mxu0 %v253
    %361 = vmatpush1.msra.mxu0 %v252
    %362 = vmatprep.subr.mxu0 %v255
    %363 = vmatpush1.msra.mxu0 %v254
    %364 = vmatprep.subr.mxu0 %v257
    %365 = vmatpush1.msra.mxu0 %v256
    %366 = vmatprep.subr.mxu0 %v259
    %367 = vmatpush1.msra.mxu0 %v258
    %368 = vmatprep.subr.mxu0 %v261
    %369 = vmatpush1.msra.mxu0 %v260
    %370 = vmatprep.subr.mxu0 %v263
    %371 = vmatpush1.msra.mxu0 %v262
    %372 = vmatprep.subr.mxu0 %v265
    %373 = vmatpush1.msra.mxu0 %v264
    %374 = vmatprep.subr.mxu0 %v267
    %375 = vmatpush1.msra.mxu0 %v266
    %376 = vmatprep.subr.mxu0 %v269
    %377 = vmatpush1.msra.mxu0 %v268
    %378 = vmatprep.subr.mxu0 %v271
    %379 = vmatpush1.msra.mxu0 %v270
    %380 = vmatprep.subr.mxu0 %v273
    %381 = vmatpush1.msra.mxu0 %v272
    %382 = vmatprep.subr.mxu0 %v275
    %383 = vmatpush1.msra.mxu0 %v274
    %384 = vmatprep.subr.mxu0 %v277
    %385 = vmatpush1.msra.mxu0 %v276
    %386 = vmatprep.subr.mxu0 %v279
    %387 = vmatpush1.msra.mxu0 %v278
    %388 = vmatprep.subr.mxu0 %v281
    %389 = vmatpush1.msra.mxu0 %v280
    %390 = vmatprep.subr.mxu0 %v283
    %391 = vmatpush1.msra.mxu0 %v282
    %392 = vmatprep.subr.mxu0 %v285
    %393 = vmatpush1.msra.mxu0 %v284
    %394 = vmatprep.subr.mxu0 %v287
    %395 = vmatpush1.msra.mxu0 %v286
    %396 = vmatprep.subr.mxu0 %v289
    %397 = vmatpush1.msra.mxu0 %v288
    %398 = vmatprep.subr.mxu0 %v291
    %399 = vmatpush1.msra.mxu0 %v290
    %400 = vmatprep.subr.mxu0 %v293
    %401 = vmatpush1.msra.mxu0 %v292
    %402 = vmatprep.subr.mxu0 %v295
    %403 = vmatpush1.msra.mxu0 %v294
    %404 = vmatprep.mubr.f32.mxu0 %v230
    %405 = vmatmul.mubr.f32.gmra.mrb[0].mxu0 %v229
    %v406 = vpop.f32.mrb[0].mxu0
    %v407 = vadd.f32 %v333, %v406
    %v408 = vpop.f32.mrb[0].mxu0
    %v409 = vadd.f32 %v337, %v408
    %410 = vdwg.mxu0
    %411 = vmatprep.subr.mxu0 %v297
    %412 = vmatpush1.msra.mxu0 %v296
    %413 = vmatprep.subr.mxu0 %v299
    %414 = vmatpush1.msra.mxu0 %v298
    %415 = vmatprep.subr.mxu0 %v301
    %416 = vmatpush1.msra.mxu0 %v300
    %417 = vmatprep.subr.mxu0 %v303
    %418 = vmatpush1.msra.mxu0 %v302
    %419 = vmatprep.subr.mxu0 %v305
    %420 = vmatpush1.msra.mxu0 %v304
    %421 = vmatprep.subr.mxu0 %v307
    %422 = vmatpush1.msra.mxu0 %v306
    %423 = vmatprep.subr.mxu0 %v309
    %424 = vmatpush1.msra.mxu0 %v308
    %425 = vmatprep.subr.mxu0 %v311
    %426 = vmatpush1.msra.mxu0 %v310
    %427 = vmatprep.subr.mxu0 %v313
    %428 = vmatpush1.msra.mxu0 %v312
    %429 = vmatprep.subr.mxu0 %v315
    %430 = vmatpush1.msra.mxu0 %v314
    %431 = vmatprep.subr.mxu0 %v317
    %432 = vmatpush1.msra.mxu0 %v316
    %433 = vmatprep.subr.mxu0 %v319
    %434 = vmatpush1.msra.mxu0 %v318
    %435 = vmatprep.subr.mxu0 %v321
    %436 = vmatpush1.msra.mxu0 %v320
    %437 = vmatprep.subr.mxu0 %v323
    %438 = vmatpush1.msra.mxu0 %v322
    %439 = vmatprep.subr.mxu0 %v325
    %440 = vmatpush1.msra.mxu0 %v324
    %441 = vmatprep.subr.mxu0 %v327
    %442 = vmatpush1.msra.mxu0 %v326
    %443 = vmatprep.subr.mxu0 0.0
    %444 = vmatpush1.msra.mxu0 0.0
    %445 = vmatprep.subr.mxu0 0.0
    %446 = vmatpush1.msra.mxu0 0.0
    %447 = vmatprep.subr.mxu0 0.0
    %448 = vmatpush1.msra.mxu0 0.0
    %449 = vmatprep.subr.mxu0 0.0
    %450 = vmatpush1.msra.mxu0 0.0
    %451 = vmatprep.subr.mxu0 0.0
    %452 = vmatpush1.msra.mxu0 0.0
    %453 = vmatprep.subr.mxu0 0.0
    %454 = vmatpush1.msra.mxu0 0.0
    %455 = vmatprep.subr.mxu0 0.0
    %456 = vmatpush1.msra.mxu0 0.0
    %457 = vmatprep.subr.mxu0 0.0
    %458 = vmatpush1.msra.mxu0 0.0
    %459 = vmatprep.subr.mxu0 0.0
    %460 = vmatpush1.msra.mxu0 0.0
    %461 = vmatprep.subr.mxu0 0.0
    %462 = vmatpush1.msra.mxu0 0.0
    %463 = vmatprep.subr.mxu0 0.0
    %464 = vmatpush1.msra.mxu0 0.0
    %465 = vmatprep.subr.mxu0 0.0
    %466 = vmatpush1.msra.mxu0 0.0
    %467 = vmatprep.subr.mxu0 0.0
    %468 = vmatpush1.msra.mxu0 0.0
    %469 = vmatprep.subr.mxu0 0.0
    %470 = vmatpush1.msra.mxu0 0.0
    %471 = vmatprep.subr.mxu0 0.0
    %472 = vmatpush1.msra.mxu0 0.0
    %473 = vmatprep.subr.mxu0 0.0
    %474 = vmatpush1.msra.mxu0 0.0
    %475 = vmatprep.mubr.f32.mxu0 0.0
    %476 = vmatmul.mubr.f32.gmra.mrb[0].mxu0 %v231
    %v477 = vpop.f32.mrb[0].mxu0
    %v478 = vadd.f32 %v407, %v477
    %v479 = vpop.f32.mrb[0].mxu0
    %v480 = vadd.f32 %v409, %v479
    %481 = vdwg.mxu0
    %v482 = vmax.f32 %v478, 0.0
    %v483 = vmax.f32 %v480, 0.0
    %v484 = vld [vmem:[#allocation4] sm:$0xff]
    %v485 = vld [vmem:[#allocation4 + $0x8] sm:$0xff]
    %v486 = vld [vmem:[#allocation4 + $0x10] sm:$0xff]
    %v487 = vld [vmem:[#allocation4 + $0x18] sm:$0xff]
    %v488 = vld [vmem:[#allocation4 + $0x20] sm:$0xff]
    %v489 = vld [vmem:[#allocation4 + $0x28] sm:$0xff]
    %v490 = vld [vmem:[#allocation4 + $0x30] sm:$0xff]
    %v491 = vld [vmem:[#allocation4 + $0x38] sm:$0xff]
    %v492 = vld [vmem:[#allocation4 + $0x40] sm:$0xff]
    %v493 = vld [vmem:[#allocation4 + $0x48] sm:$0xff]
    %v494 = vld [vmem:[#allocation4 + $0x50] sm:$0xff]
    %v495 = vld [vmem:[#allocation4 + $0x58] sm:$0xff]
    %v496 = vld [vmem:[#allocation4 + $0x60] sm:$0xff]
    %v497 = vld [vmem:[#allocation4 + $0x68] sm:$0xff]
    %v498 = vld [vmem:[#allocation4 + $0x70] sm:$0xff]
    %v499 = vld [vmem:[#allocation4 + $0x78] sm:$0xff]
    %v500 = vld [vmem:[#allocation4 + $0x80] sm:$0xff]
    %v501 = vld [vmem:[#allocation4 + $0x88] sm:$0xff]
    %v502 = vld [vmem:[#allocation4 + $0x90] sm:$0xff]
    %v503 = vld [vmem:[#allocation4 + $0x98] sm:$0xff]
    %v504 = vld [vmem:[#allocation4 + $0xa0] sm:$0xff]
    %v505 = vld [vmem:[#allocation4 + $0xa8] sm:$0xff]
    %v506 = vld [vmem:[#allocation4 + $0xb0] sm:$0xff]
    %v507 = vld [vmem:[#allocation4 + $0xb8] sm:$0xff]
    %v508 = vld [vmem:[#allocation4 + $0xc0] sm:$0xff]
    %v509 = vld [vmem:[#allocation4 + $0xc8] sm:$0xff]
    %v510 = vld [vmem:[#allocation4 + $0xd0] sm:$0xff]
    %v511 = vld [vmem:[#allocation4 + $0xd8] sm:$0xff]
    %v512 = vld [vmem:[#allocation4 + $0xe0] sm:$0xff]
    %v513 = vld [vmem:[#allocation4 + $0xe8] sm:$0xff]
    %v514 = vld [vmem:[#allocation4 + $0xf0] sm:$0xff]
    %v515 = vld [vmem:[#allocation4 + $0xf8] sm:$0xff]
    %v516 = vld [vmem:[#allocation4 + $0x100] sm:$0xff]
    %v517 = vld [vmem:[#allocation4 + $0x108] sm:$0xff]
    %v518 = vld [vmem:[#allocation4 + $0x110] sm:$0xff]
    %v519 = vld [vmem:[#allocation4 + $0x118] sm:$0xff]
    %v520 = vld [vmem:[#allocation4 + $0x120] sm:$0xff]
    %v521 = vld [vmem:[#allocation4 + $0x128] sm:$0xff]
    %v522 = vld [vmem:[#allocation4 + $0x130] sm:$0xff]
    %v523 = vld [vmem:[#allocation4 + $0x138] sm:$0xff]
    %v524 = vld [vmem:[#allocation4 + $0x140] sm:$0xff]
    %v525 = vld [vmem:[#allocation4 + $0x148] sm:$0xff]
    %v526 = vld [vmem:[#allocation4 + $0x150] sm:$0xff]
    %v527 = vld [vmem:[#allocation4 + $0x158] sm:$0xff]
    %v528 = vld [vmem:[#allocation4 + $0x160] sm:$0xff]
    %v529 = vld [vmem:[#allocation4 + $0x168] sm:$0xff]
    %v530 = vld [vmem:[#allocation4 + $0x170] sm:$0xff]
    %v531 = vld [vmem:[#allocation4 + $0x178] sm:$0xff]
    %v532 = vld [vmem:[#allocation4 + $0x180] sm:$0xff]
    %v533 = vld [vmem:[#allocation4 + $0x188] sm:$0xff]
    %v534 = vld [vmem:[#allocation4 + $0x190] sm:$0xff]
    %v535 = vld [vmem:[#allocation4 + $0x198] sm:$0xff]
    %v536 = vld [vmem:[#allocation4 + $0x1a0] sm:$0xff]
    %v537 = vld [vmem:[#allocation4 + $0x1a8] sm:$0xff]
    %v538 = vld [vmem:[#allocation4 + $0x1b0] sm:$0xff]
    %v539 = vld [vmem:[#allocation4 + $0x1b8] sm:$0xff]
    %v540 = vld [vmem:[#allocation4 + $0x1c0] sm:$0xff]
    %v541 = vld [vmem:[#allocation4 + $0x1c8] sm:$0xff]
    %v542 = vld [vmem:[#allocation4 + $0x1d0] sm:$0xff]
    %v543 = vld [vmem:[#allocation4 + $0x1d8] sm:$0xff]
    %v544 = vld [vmem:[#allocation4 + $0x1e0] sm:$0xff]
    %v545 = vld [vmem:[#allocation4 + $0x1e8] sm:$0xff]
    %v546 = vld [vmem:[#allocation4 + $0x1f0] sm:$0xff]
    %v547 = vld [vmem:[#allocation4 + $0x1f8] sm:$0xff]
    %v548 = vld [vmem:[%s6] sm:$0x3]
    %v550 = vlaneseq
    %v551 = vshrl.u32 %v550, 7
    %v552 = vsub.s32 0, %v551
    %v553 = vrot.slane %v548, %v552
    %v554 = vlaneseq
    %v555 = vshrl.u32 %v554, 7
    %v556 = vsub.s32 1, %v555
    %v557 = vrot.slane %v548, %v556
    %560 = vmatprep.subr.mxu0 %v485
    %561 = vmatpush1.msra.mxu0 %v484
    %562 = vmatprep.subr.mxu0 %v487
    %563 = vmatpush1.msra.mxu0 %v486
    %564 = vmatprep.subr.mxu0 %v489
    %565 = vmatpush1.msra.mxu0 %v488
    %566 = vmatprep.subr.mxu0 %v491
    %567 = vmatpush1.msra.mxu0 %v490
    %568 = vmatprep.subr.mxu0 %v493
    %569 = vmatpush1.msra.mxu0 %v492
    %570 = vmatprep.subr.mxu0 %v495
    %571 = vmatpush1.msra.mxu0 %v494
    %572 = vmatprep.subr.mxu0 %v497
    %573 = vmatpush1.msra.mxu0 %v496
    %574 = vmatprep.subr.mxu0 %v499
    %575 = vmatpush1.msra.mxu0 %v498
    %576 = vmatprep.subr.mxu0 %v501
    %577 = vmatpush1.msra.mxu0 %v500
    %578 = vmatprep.subr.mxu0 %v503
    %579 = vmatpush1.msra.mxu0 %v502
    %580 = vmatprep.subr.mxu0 %v505
    %581 = vmatpush1.msra.mxu0 %v504
    %582 = vmatprep.subr.mxu0 %v507
    %583 = vmatpush1.msra.mxu0 %v506
    %584 = vmatprep.subr.mxu0 %v509
    %585 = vmatpush1.msra.mxu0 %v508
    %586 = vmatprep.subr.mxu0 %v511
    %587 = vmatpush1.msra.mxu0 %v510
    %588 = vmatprep.subr.mxu0 %v513
    %589 = vmatpush1.msra.mxu0 %v512
    %590 = vmatprep.subr.mxu0 %v515
    %591 = vmatpush1.msra.mxu0 %v514
    %592 = vmatprep.subr.mxu0 %v517
    %593 = vmatpush1.msra.mxu0 %v516
    %594 = vmatprep.subr.mxu0 %v519
    %595 = vmatpush1.msra.mxu0 %v518
    %596 = vmatprep.subr.mxu0 %v521
    %597 = vmatpush1.msra.mxu0 %v520
    %598 = vmatprep.subr.mxu0 %v523
    %599 = vmatpush1.msra.mxu0 %v522
    %600 = vmatprep.subr.mxu0 %v525
    %601 = vmatpush1.msra.mxu0 %v524
    %602 = vmatprep.subr.mxu0 %v527
    %603 = vmatpush1.msra.mxu0 %v526
    %604 = vmatprep.subr.mxu0 %v529
    %605 = vmatpush1.msra.mxu0 %v528
    %606 = vmatprep.subr.mxu0 %v531
    %607 = vmatpush1.msra.mxu0 %v530
    %608 = vmatprep.subr.mxu0 %v533
    %609 = vmatpush1.msra.mxu0 %v532
    %610 = vmatprep.subr.mxu0 %v535
    %611 = vmatpush1.msra.mxu0 %v534
    %612 = vmatprep.subr.mxu0 %v537
    %613 = vmatpush1.msra.mxu0 %v536
    %614 = vmatprep.subr.mxu0 %v539
    %615 = vmatpush1.msra.mxu0 %v538
    %616 = vmatprep.subr.mxu0 %v541
    %617 = vmatpush1.msra.mxu0 %v540
    %618 = vmatprep.subr.mxu0 %v543
    %619 = vmatpush1.msra.mxu0 %v542
    %620 = vmatprep.subr.mxu0 %v545
    %621 = vmatpush1.msra.mxu0 %v544
    %622 = vmatprep.subr.mxu0 %v547
    %623 = vmatpush1.msra.mxu0 %v546
    %624 = vmatprep.mubr.f32.mxu0 %v483
    %625 = vmatmul.mubr.f32.gmra.mrb[0].mxu0 %v482
    %v626 = vpop.f32.mrb[0].mxu0
    %v627 = vadd.f32 %v553, %v626
    %v628 = vpop.f32.mrb[0].mxu0
    %v629 = vadd.f32 %v557, %v628
    %630 = vdwg.mxu0
    %v631 = vmax.f32 %v627, 0.0
    %v632 = vmax.f32 %v629, 0.0
    %v633 = vld [vmem:[%s7] sm:$0xff]
    %v634 = vld [vmem:[%s7 + $0x8] sm:$0xff]
    %v635 = vld [vmem:[%s7 + $0x10] sm:$0xff]
    %v636 = vld [vmem:[%s7 + $0x18] sm:$0xff]
    %v637 = vld [vmem:[%s7 + $0x20] sm:$0xff]
    %v638 = vld [vmem:[%s7 + $0x28] sm:$0xff]
    %v639 = vld [vmem:[%s7 + $0x30] sm:$0xff]
    %v640 = vld [vmem:[%s7 + $0x38] sm:$0xff]
    %v641 = vld [vmem:[%s7 + $0x40] sm:$0xff]
    %v642 = vld [vmem:[%s7 + $0x48] sm:$0xff]
    %v643 = vld [vmem:[%s7 + $0x50] sm:$0xff]
    %v644 = vld [vmem:[%s7 + $0x58] sm:$0xff]
    %v645 = vld [vmem:[%s7 + $0x60] sm:$0xff]
    %v646 = vld [vmem:[%s7 + $0x68] sm:$0xff]
    %v647 = vld [vmem:[%s7 + $0x70] sm:$0xff]
    %v648 = vld [vmem:[%s7 + $0x78] sm:$0xff]
    %v649 = vld [vmem:[%s7 + $0x80] sm:$0xff]
    %v650 = vld [vmem:[%s7 + $0x88] sm:$0xff]
    %v651 = vld [vmem:[%s7 + $0x90] sm:$0xff]
    %v652 = vld [vmem:[%s7 + $0x98] sm:$0xff]
    %v653 = vld [vmem:[%s7 + $0xa0] sm:$0xff]
    %v654 = vld [vmem:[%s7 + $0xa8] sm:$0xff]
    %v655 = vld [vmem:[%s7 + $0xb0] sm:$0xff]
    %v656 = vld [vmem:[%s7 + $0xb8] sm:$0xff]
    %v657 = vld [vmem:[%s7 + $0xc0] sm:$0xff]
    %v658 = vld [vmem:[%s7 + $0xc8] sm:$0xff]
    %v659 = vld [vmem:[%s7 + $0xd0] sm:$0xff]
    %v660 = vld [vmem:[%s7 + $0xd8] sm:$0xff]
    %v661 = vld [vmem:[%s7 + $0xe0] sm:$0xff]
    %v662 = vld [vmem:[%s7 + $0xe8] sm:$0xff]
    %v663 = vld [vmem:[%s7 + $0xf0] sm:$0xff]
    %v664 = vld [vmem:[%s7 + $0xf8] sm:$0xff]
    %v665 = vld [vmem:[%s8] sm:$0x1]
    %v667 = vlaneseq
    %v668 = vshrl.u32 %v667, 7
    %v669 = vsub.s32 0, %v668
    %v670 = vrot.slane %v665, %v669
    %672 = vmatprep.subr.mxu0 0.0
    %673 = vmatpush1.msra.mxu0 %v633
    %674 = vmatprep.subr.mxu0 0.0
    %675 = vmatpush1.msra.mxu0 %v634
    %676 = vmatprep.subr.mxu0 0.0
    %677 = vmatpush1.msra.mxu0 %v635
    %678 = vmatprep.subr.mxu0 0.0
    %679 = vmatpush1.msra.mxu0 %v636
    %680 = vmatprep.subr.mxu0 0.0
    %681 = vmatpush1.msra.mxu0 %v637
    %682 = vmatprep.subr.mxu0 0.0
    %683 = vmatpush1.msra.mxu0 %v638
    %684 = vmatprep.subr.mxu0 0.0
    %685 = vmatpush1.msra.mxu0 %v639
    %686 = vmatprep.subr.mxu0 0.0
    %687 = vmatpush1.msra.mxu0 %v640
    %688 = vmatprep.subr.mxu0 0.0
    %689 = vmatpush1.msra.mxu0 %v641
    %690 = vmatprep.subr.mxu0 0.0
    %691 = vmatpush1.msra.mxu0 %v642
    %692 = vmatprep.subr.mxu0 0.0
    %693 = vmatpush1.msra.mxu0 %v643
    %694 = vmatprep.subr.mxu0 0.0
    %695 = vmatpush1.msra.mxu0 %v644
    %696 = vmatprep.subr.mxu0 0.0
    %697 = vmatpush1.msra.mxu0 %v645
    %698 = vmatprep.subr.mxu0 0.0
    %699 = vmatpush1.msra.mxu0 %v646
    %700 = vmatprep.subr.mxu0 0.0
    %701 = vmatpush1.msra.mxu0 %v647
    %702 = vmatprep.subr.mxu0 0.0
    %703 = vmatpush1.msra.mxu0 %v648
    %704 = vmatprep.subr.mxu0 0.0
    %705 = vmatpush1.msra.mxu0 %v649
    %706 = vmatprep.subr.mxu0 0.0
    %707 = vmatpush1.msra.mxu0 %v650
    %708 = vmatprep.subr.mxu0 0.0
    %709 = vmatpush1.msra.mxu0 %v651
    %710 = vmatprep.subr.mxu0 0.0
    %711 = vmatpush1.msra.mxu0 %v652
    %712 = vmatprep.subr.mxu0 0.0
    %713 = vmatpush1.msra.mxu0 %v653
    %714 = vmatprep.subr.mxu0 0.0
    %715 = vmatpush1.msra.mxu0 %v654
    %716 = vmatprep.subr.mxu0 0.0
    %717 = vmatpush1.msra.mxu0 %v655
    %718 = vmatprep.subr.mxu0 0.0
    %719 = vmatpush1.msra.mxu0 %v656
    %720 = vmatprep.subr.mxu0 0.0
    %721 = vmatpush1.msra.mxu0 %v657
    %722 = vmatprep.subr.mxu0 0.0
    %723 = vmatpush1.msra.mxu0 %v658
    %724 = vmatprep.subr.mxu0 0.0
    %725 = vmatpush1.msra.mxu0 %v659
    %726 = vmatprep.subr.mxu0 0.0
    %727 = vmatpush1.msra.mxu0 %v660
    %728 = vmatprep.subr.mxu0 0.0
    %729 = vmatpush1.msra.mxu0 %v661
    %730 = vmatprep.subr.mxu0 0.0
    %731 = vmatpush1.msra.mxu0 %v662
    %732 = vmatprep.subr.mxu0 0.0
    %733 = vmatpush1.msra.mxu0 %v663
    %734 = vmatprep.subr.mxu0 0.0
    %735 = vmatpush1.msra.mxu0 %v664
    %736 = vmatprep.mubr.f32.mxu0 %v632
    %737 = vmatmul.mubr.f32.gmra.mrb[0].mxu0 %v631
    %v738 = vpop.f32.mrb[0].mxu0
    %v739 = vadd.f32 %v670, %v738
    %v740 = vpop.f32.mrb[0].mxu0
    %741 = vdwg.mxu0
    %vm742 = vcmask 64512
    %743 = vst.msk [vmem:[%s9] sm:$0xff] %vm742, %v739
    // Predicated region
    $region46: #{_dqn_forward_impl.1} parent=1 // pred_check
      _
    $region47: #{_dqn_forward_impl.1} parent=1 // pred_check_branch
      %745 = sbr.rel (0) target = $region49
    $region48: #{_dqn_forward_impl.1} parent=1 // pred_region
      _
    $region49: #{_dqn_forward_impl.1} parent=1 // pred_fallthru
      _
    // Predicated region
    $region50: #{_dqn_forward_impl.1} parent=1 // pred_check
      _
    $region51: #{_dqn_forward_impl.1} parent=1 // pred_check_branch
      %747 = sbr.rel (0) target = $region53
    $region52: #{_dqn_forward_impl.1} parent=1 // pred_region
      _
    $region53: #{_dqn_forward_impl.1} parent=1 // pred_fallthru
      _
    %748 = vsyncpa [#allocation3], 1
    %749 = vsyncpa [#allocation5], 1

</llo_original>
